<compile_context>
chip_gen: v5e
topology: v5e:2x2
jax: 0.10.0
libtpu: 0.0.40
codegen_flags: <defaults>
</compile_context>

<pallas_src>
import functools

import jax
import jax.numpy as jnp
from jax import lax
from jax.experimental import pallas as pl
from jax.experimental.pallas import tpu as pltpu


def _round_up(x: int, m: int) -> int:
    return ((x + m - 1) // m) * m


# ----------------------------------------------------------------------------
# Kernels
# ----------------------------------------------------------------------------
def _linear_noK_kernel(x_ref, w_ref, o_ref):
    # x: [tm, tk], w: [tn, tk]; contract the shared embed (last) dims -> x @ w^T.
    o_ref[...] = lax.dot_general(
        x_ref[...],
        w_ref[...],
        dimension_numbers=(((1,), (1,)), ((), ())),
        preferred_element_type=jnp.float32,
    ).astype(o_ref.dtype)


def _linear_acc_kernel(x_ref, w_ref, o_ref, acc_ref):
    # grid = (M_tiles, V_tiles, K_tiles); K (embed) is the reduction -> last axis.
    @pl.when(pl.program_id(2) == 0)
    def _():
        acc_ref[...] = jnp.zeros_like(acc_ref)

    acc_ref[...] += lax.dot_general(
        x_ref[...],
        w_ref[...],
        dimension_numbers=(((1,), (1,)), ((), ())),
        preferred_element_type=jnp.float32,
    )

    @pl.when(pl.program_id(2) == pl.num_programs(2) - 1)
    def _():
        o_ref[...] = acc_ref[...].astype(o_ref.dtype)


# ----------------------------------------------------------------------------
# Generation-aware VMEM budget
# ----------------------------------------------------------------------------
def _vmem_budget():
    """Returns (tile_budget_bytes, vmem_limit_bytes)."""
    try:
        cap = int(pltpu.get_tpu_info().vmem_capacity_bytes)
    except Exception:
        cap = 64 << 20  # conservative: assume v7x-sized (64 MiB per TC) VMEM
    if cap >= (128 << 20):  # v5e / v6e
        return 96 << 20, 112 << 20
    # v7x (64 MiB per TC): leave headroom for Mosaic internal scratch / DMA.
    return 40 << 20, 52 << 20


# ----------------------------------------------------------------------------
# Tile selection (static, shape-driven)
# ----------------------------------------------------------------------------
def _divisor_tiles(total, cap, unit):
    """Multiples of `unit` dividing round_up(total, unit), descending, <= cap."""
    tr = _round_up(max(total, unit), unit)
    hi = min(cap, tr)
    cands = [d for d in range(unit, hi + 1, unit) if tr % d == 0]
    if not cands:
        cands = [min(_round_up(hi, unit), tr)]
    return sorted(set(cands), reverse=True)


def _select_tiles(M, V, E, comp_isz, out_isz, budget_bytes):
    """Pick (tm, tn, tk) under a double-buffered VMEM budget.

    tm % 8 == 0, tn % 128 == 0, tk % 128 == 0.  Weight HBM re-reads scale as
    1/tm and x re-reads as 1/tn, so tm and tn are kept roughly square and as
    large as the budget allows; tk is shrunk first (it only changes the number
    of k-steps, not HBM traffic).
    """
    Mr = _round_up(max(M, 8), 8)
    tn_cands = _divisor_tiles(V, 2048, 128)
    tk_cands = _divisor_tiles(E, 1024, 128)

    tm_cands, t = [], min(2048, Mr)
    while t >= 8:
        tm_cands.append(_round_up(t, 8))
        t //= 2
    tm_cands = sorted(set(tm_cands), reverse=True)

    im = iN = ik = 0
    tm, tn, tk = tm_cands[0], tn_cands[0], tk_cands[0]

    def cost(tm_, tn_, tk_):
        # double-buffered x / w / out tiles + f32 accumulator (worst case).
        return (2 * (tm_ * tk_ + tn_ * tk_) * comp_isz
                + 2 * tm_ * tn_ * out_isz
                + tm_ * tn_ * 4)

    while cost(tm, tn, tk) > budget_bytes:
        # 1) shrink K first: no HBM-traffic change, only more k-steps.
        if tk > 256 and ik + 1 < len(tk_cands):
            ik += 1; tk = tk_cands[ik]; continue
        # 2) keep tm ~ tn roughly square; shrink the larger one. Keep tn >= 512
        #    where possible (lane-dense stores matter most on v5e's single vst).
        if tm >= tn and tm > 256 and im + 1 < len(tm_cands):
            im += 1; tm = tm_cands[im]; continue
        if iN + 1 < len(tn_cands) and tn_cands[iN + 1] >= 512:
            iN += 1; tn = tn_cands[iN]; continue
        if tm > 256 and im + 1 < len(tm_cands):
            im += 1; tm = tm_cands[im]; continue
        # 3) last resorts.
        if ik + 1 < len(tk_cands):
            ik += 1; tk = tk_cands[ik]; continue
        if iN + 1 < len(tn_cands):
            iN += 1; tn = tn_cands[iN]; continue
        if im + 1 < len(tm_cands):
            im += 1; tm = tm_cands[im]; continue
        break
    return tm, tn, tk


# ----------------------------------------------------------------------------
# Public wrapper: out[b, s, v] = sum_e x[b, s, e] * weight[v, e]
# ----------------------------------------------------------------------------
@functools.partial(jax.jit, static_argnames=("tm", "tn", "tk", "compute_dtype"))
def output_layer(x, weight, *, tm=None, tn=None, tk=None,
                 compute_dtype=jnp.bfloat16):
    """Equivalent of nn.Linear(embed, vocab, bias=False): x @ weight.T.

    x:      [batch, seq, embed]
    weight: [vocab, embed]   (PyTorch nn.Linear.weight layout, NOT transposed)
    returns [batch, seq, vocab]   (dtype follows x)
    """
    batch, seq, embed = x.shape
    vocab, embed_w = weight.shape
    assert embed_w == embed, "weight must be [vocab, embed]"
    M = batch * seq
    out_dtype = x.dtype

    # Matmul operand dtype: bf16 by default (f32 accumulation), never up-cast.
    cdt = jnp.dtype(compute_dtype) if compute_dtype is not None else jnp.dtype(x.dtype)
    if jnp.dtype(x.dtype).itemsize < cdt.itemsize:
        cdt = jnp.dtype(x.dtype)
    comp_isz = cdt.itemsize
    out_isz = jnp.dtype(out_dtype).itemsize

    budget, vmem_limit = _vmem_budget()
    stm, stn, stk = _select_tiles(M, vocab, embed, comp_isz, out_isz, budget)
    tn_explicit = tn is not None
    tm = stm if tm is None else tm
    tn = stn if tn is None else tn
    tk = stk if tk is None else tk

    # v7x megacore: keep at least 2 parallel grid slices when possible.
    if (not tn_explicit and tn > 128
            and pl.cdiv(M, tm) * pl.cdiv(vocab, tn) < 2):
        tn = max(128, _round_up(tn // 2, 128))

    x2d = x.reshape(M, embed).astype(cdt)
    w = weight.astype(cdt)

    # Only the K (reduction) axis needs explicit zero padding: ragged M / V
    # tiles are masked on write-back.  With divisor-based tk this only fires
    # when embed % 128 != 0 (rare for real models).
    Ep = _round_up(embed, tk)
    if Ep != embed:
        x2d = jnp.pad(x2d, ((0, 0), (0, Ep - embed)))
        w = jnp.pad(w, ((0, 0), (0, Ep - embed)))

    k_steps = Ep // tk
    m_tiles = pl.cdiv(M, tm)
    v_tiles = pl.cdiv(vocab, tn)

    cost = pl.CostEstimate(
        flops=int(2 * M * Ep * vocab),
        transcendentals=0,
        bytes_accessed=int(m_tiles * vocab * Ep * comp_isz     # weight re-reads
                           + v_tiles * M * Ep * comp_isz       # x re-reads
                           + M * vocab * out_isz),             # output write
    )

    if k_steps == 1:
        # Whole embed dim in one tile: no reduction axis, no accumulator.
        out2d = pl.pallas_call(
            _linear_noK_kernel,
            out_shape=jax.ShapeDtypeStruct((M, vocab), out_dtype),
            grid_spec=pltpu.PrefetchScalarGridSpec(
                num_scalar_prefetch=0,
                grid=(m_tiles, v_tiles),
                in_specs=[
                    pl.BlockSpec((tm, tk), lambda i, j: (i, 0)),
                    pl.BlockSpec((tn, tk), lambda i, j: (j, 0)),
                ],
                out_specs=pl.BlockSpec((tm, tn), lambda i, j: (i, j)),
            ),
            compiler_params=pltpu.CompilerParams(
                dimension_semantics=("parallel", "parallel"),
                vmem_limit_bytes=vmem_limit,
            ),
            cost_estimate=cost,
        )(x2d, w)
    else:
        out2d = pl.pallas_call(
            _linear_acc_kernel,
            out_shape=jax.ShapeDtypeStruct((M, vocab), out_dtype),
            grid_spec=pltpu.PrefetchScalarGridSpec(
                num_scalar_prefetch=0,
                grid=(m_tiles, v_tiles, k_steps),
                in_specs=[
                    pl.BlockSpec((tm, tk), lambda i, j, k: (i, k)),
                    pl.BlockSpec((tn, tk), lambda i, j, k: (j, k)),
                ],
                out_specs=pl.BlockSpec((tm, tn), lambda i, j, k: (i, j)),
                scratch_shapes=[pltpu.VMEM((tm, tn), jnp.float32)],
            ),
            compiler_params=pltpu.CompilerParams(
                dimension_semantics=("parallel", "parallel", "arbitrary"),
                vmem_limit_bytes=vmem_limit,
            ),
            cost_estimate=cost,
        )(x2d, w)

    return out2d.reshape(batch, seq, vocab)


if __name__ == "__main__":
    # Small, tile-friendly shapes implied by the module: embed -> vocab projection.
    batch, seq, embed, vocab = 2, 8, 128, 256

    key = jax.random.PRNGKey(0)
    kx, kw = jax.random.split(key)
    x = jax.random.normal(kx, (batch, seq, embed), dtype=jnp.float32)
    # Deterministic synthetic weight, matching nn.Linear's (vocab, embed) layout.
    weight = (
        jax.random.uniform(kw, (vocab, embed), dtype=jnp.float32) - 0.5
    ) * (2.0 / (embed ** 0.5))

    # 1) Default path: bf16 operands, f32 accumulation, f32 output.
    out = output_layer(x, weight)
    jax.block_until_ready(out)
    ref_bf16 = jnp.einsum(
        "bse,ve->bsv",
        x.astype(jnp.bfloat16), weight.astype(jnp.bfloat16),
        preferred_element_type=jnp.float32,
    ).astype(x.dtype)
    assert out.shape == (batch, seq, vocab)
    assert jnp.allclose(out, ref_bf16, atol=1e-2, rtol=1e-2)

    # 2) Exact-f32 path (preserves the module's numerics exactly).
    out_f32 = output_layer(x, weight, compute_dtype=jnp.float32)
    jax.block_until_ready(out_f32)
    ref_f32 = jnp.einsum("bse,ve->bsv", x, weight)
    assert jnp.allclose(out_f32, ref_f32, atol=1e-4, rtol=1e-4)

    # 3) Split-K + ragged-V path (no weight/output padding, cdiv-masked tiles).
    b2, s2, e2, v2 = 2, 24, 384, 1000
    x2 = jax.random.normal(jax.random.PRNGKey(1), (b2, s2, e2), dtype=jnp.float32)
    w2 = jax.random.normal(jax.random.PRNGKey(2), (v2, e2), dtype=jnp.float32) * 0.05
    out2 = output_layer(x2, w2, tm=16, tn=256, tk=128, compute_dtype=jnp.float32)
    jax.block_until_ready(out2)
    ref2 = jnp.einsum("bse,ve->bsv", x2, w2)
    assert out2.shape == (b2, s2, v2)
    assert jnp.allclose(out2, ref2, atol=1e-3, rtol=1e-3)

    print("KERNEL_OK")
</pallas_src>

<mosaic_0001>
module attributes {stable_mosaic.version = 11 : i64} {
  func.func @_linear_noK_kernel(%arg0: i32, %arg1: i32, %arg2: memref<16x128xbf16, #tpu.memory_space<vmem>>, %arg3: memref<128x128xbf16, #tpu.memory_space<vmem>>, %arg4: memref<16x128xf32, #tpu.memory_space<vmem>>) attributes {dimension_semantics = [#tpu.dimension_semantics<parallel>, #tpu.dimension_semantics<parallel>], iteration_bounds = array<i64: 1, 2>, scalar_prefetch = 0 : i64, scratch_operands = 0 : i64, tpu.core_type = #tpu.core_type<tc>, window_params = [{transform_indices = @transform_0, window_bounds = array<i64: 16, 128>}, {transform_indices = @transform_1, window_bounds = array<i64: 128, 128>}, {transform_indices = @transform_2, window_bounds = array<i64: 16, 128>}]} {
    %c0 = arith.constant 0 : index
    %c0_0 = arith.constant 0 : index
    %0 = vector.load %arg2[%c0, %c0_0] : memref<16x128xbf16, #tpu.memory_space<vmem>>, vector<16x128xbf16>
    %c0_1 = arith.constant 0 : index
    %c0_2 = arith.constant 0 : index
    %1 = vector.load %arg3[%c0_1, %c0_2] : memref<128x128xbf16, #tpu.memory_space<vmem>>, vector<128x128xbf16>
    %cst = arith.constant dense<0.000000e+00> : vector<16x128xf32>
    %2 = tpu.matmul %0, %1, %cst {dimension_numbers = #tpu.dot_dimension_numbers<[1], [1], [0], [0], [0, 0, 1, 0], [], []>} : vector<16x128xbf16>, vector<128x128xbf16>, vector<16x128xf32> -> vector<16x128xf32>
    %c0_3 = arith.constant 0 : index
    %c0_4 = arith.constant 0 : index
    %3 = vector.load %arg4[%c0_3, %c0_4] : memref<16x128xf32, #tpu.memory_space<vmem>>, vector<16x128xf32>
    tpu.vector_store %arg4[%c0_3, %c0_4], %2 {strides = array<i32>} : memref<16x128xf32, #tpu.memory_space<vmem>>, vector<16x128xf32>,
    return
  }
  func.func @transform_0(%arg0: i32, %arg1: i32) -> (i32, i32) {
    %c0_i32 = arith.constant 0 : i32
    %c0_i32_0 = arith.constant 0 : i32
    return %arg0, %c0_i32 : i32, i32
  }
  func.func @transform_1(%arg0: i32, %arg1: i32) -> (i32, i32) {
    %c0_i32 = arith.constant 0 : i32
    %c0_i32_0 = arith.constant 0 : i32
    return %arg1, %c0_i32 : i32, i32
  }
  func.func @transform_2(%arg0: i32, %arg1: i32) -> (i32, i32) {
    %c0_i32 = arith.constant 0 : i32
    return %arg0, %arg1 : i32, i32
  }
}

</mosaic_0001>

<llo_original>
// kernel: output_layer.1
$region0: #{output_layer.1}
  #allocation0 [shape = 'u32[]', space=smem, size = 0x4, offset = 0x4, fixed_abs, tag = 'smem constant byte address 0x4 - core index']
  #allocation1 [shape = 'u32[72,128]{1,0:T(1,128)}', space=vmem, size = 0x9000, scoped, tag = 'internal scratch']
  %s0 = inlined_call_operand.vmem [shape: bf16[16,128], index: 0, kind: input, shape index: {}]
  %s1 = inlined_call_operand.vmem [shape: bf16[256,128], index: 1, kind: input, shape index: {}]
  %s2 = inlined_call_operand.hbm [shape: f32[16,256], index: 2, kind: output, shape index: {}]
  %s3 = sld [smem:[#allocation0]]
  $region41: #{output_layer.1} parent=0
    _
  %s5 = ssub.s32 1, %s3
  %s6 = scalar_select 0, %s5, %s3
  $region1: #{output_layer.1} parent=0
    #allocation2 [shape = 'u8[16384]{0}', space=vmem, size = 0x4000, scoped, tag = 'output window, operand 0']
    #allocation3 [shape = 's32[2]{0}', space=sflag, size = 0x8, scoped, tag = 'scoped memory for output_layer.1']
    %7 = vsyncpa [#allocation3], 0
    %s8 = scalar_lea.sflag [#allocation3], 1
    %9 = vsyncpa %s8, 0
    loop: start=0, step=1, limit=4
    $region2: #{output_layer.1} parent=1 // loop_pre_header
      _
    $region3: #{output_layer.1} parent=1 // loop_header
      %s11 = sphi 0, %s15
      %p12 = scmp.ge.s32.totalorder %s11, 4
      %s18 = sphi 0, %s30
      %s19 = sphi 0, %s26
      %s20 = sphi 0, %s18
      %s21 = sphi 0, %s19
      %s22 = sphi 0, %s20
      %s23 = sphi 0, %s21
      %s33 = sphi 0, %s35
      %s36 = sphi 0, %s33
      %s37 = sphi 0, %s36
      %s53 = sphi 0, %s37
      %s59 = sphi 0, %s61
      %s62 = sphi 0, %s59
      %s63 = sphi 0, %s62
      %s79 = sphi 0, %s63
      %s87 = sphi 0, %s89
      %s90 = sphi 0, %s87
      %s91 = sphi 0, %s90
      %s107 = sphi 0, %s91
    $region4: #{output_layer.1} parent=1 // loop_header_branch
      %14 = sbr.rel (%p12) target = $region8
    $region5: #{output_layer.1} parent=1 // loop_body
      %s16 = ssub.s32 %s11, 1
      %s17 = ssub.s32 %s11, 2
      %s24 = sadd.s32 1, %s19
      %p25 = scmp.ge.s32.totalorder %s24, 2
      %s26 = scalar_select %p25, 0, %s24
      %s27 = sadd.s32 1, %s18
      %s28 = scalar_select %p25, %s27, %s18
      %p29 = scmp.ge.s32.totalorder %s28, 1
      %s30 = scalar_select %p29, 0, %s28
      %s31 = ssub.s32 %s18, %s30
      %p32 = scmp.eq.s32.totalorder %s31, 0
      %s34 = sadd.s32 %s33, 1
      %s35 = scalar_select %p32, %s33, %s34
      %p38 = pneg %p32
      %p39 = scmp.eq.s32.totalorder %s11, 1
      %p40 = por %p38, %p39
      %p41 = scmp.ne.s32.totalorder %s33, %s36
      %p42 = scmp.eq.s32.totalorder %s11, 0
      %p43 = por %p41, %p42
      %p44 = scmp.ne.s32.totalorder %s33, %s36
      %p45 = scmp.eq.s32.totalorder %s16, 1
      %p46 = por %p44, %p45
      %p47 = scmp.ne.s32.totalorder %s36, %s37
      %p48 = scmp.eq.s32.totalorder %s16, 0
      %p49 = por %p47, %p48
      %p50 = scmp.ne.s32.totalorder %s36, %s37
      %p51 = scmp.eq.s32.totalorder %s17, 1
      %p52 = por %p50, %p51
      %p54 = scmp.ne.s32.totalorder %s37, %s53
      %p55 = scmp.eq.s32.totalorder %s17, 0
      %p56 = por %p54, %p55
      %s57 = ssub.s32 %s19, %s26
      %p58 = scmp.eq.s32.totalorder %s57, 0
      %s60 = sadd.s32 %s59, 1
      %s61 = scalar_select %p58, %s59, %s60
      %p64 = pneg %p58
      %p65 = scmp.eq.s32.totalorder %s11, 1
      %p66 = por %p64, %p65
      %p67 = scmp.ne.s32.totalorder %s59, %s62
      %p68 = scmp.eq.s32.totalorder %s11, 0
      %p69 = por %p67, %p68
      %p70 = scmp.ne.s32.totalorder %s59, %s62
      %p71 = scmp.eq.s32.totalorder %s16, 1
      %p72 = por %p70, %p71
      %p73 = scmp.ne.s32.totalorder %s62, %s63
      %p74 = scmp.eq.s32.totalorder %s16, 0
      %p75 = por %p73, %p74
      %p76 = scmp.ne.s32.totalorder %s62, %s63
      %p77 = scmp.eq.s32.totalorder %s17, 1
      %p78 = por %p76, %p77
      %p80 = scmp.ne.s32.totalorder %s63, %s79
      %p81 = scmp.eq.s32.totalorder %s17, 0
      %p82 = por %p80, %p81
      %s83 = ssub.s32 %s18, %s30
      %s84 = ssub.s32 %s19, %s26
      %s85 = sor.u32 %s83, %s84
      %p86 = scmp.eq.s32.totalorder %s85, 0
      %s88 = sadd.s32 %s87, 1
      %s89 = scalar_select %p86, %s87, %s88
      %p92 = pneg %p86
      %p93 = scmp.eq.s32.totalorder %s11, 1
      %p94 = por %p92, %p93
      %p95 = scmp.ne.s32.totalorder %s87, %s90
      %p96 = scmp.eq.s32.totalorder %s11, 0
      %p97 = por %p95, %p96
      %p98 = scmp.ne.s32.totalorder %s87, %s90
      %p99 = scmp.eq.s32.totalorder %s16, 1
      %p100 = por %p98, %p99
      %p101 = scmp.ne.s32.totalorder %s90, %s91
      %p102 = scmp.eq.s32.totalorder %s16, 0
      %p103 = por %p101, %p102
      %p104 = scmp.ne.s32.totalorder %s90, %s91
      %p105 = scmp.eq.s32.totalorder %s17, 1
      %p106 = por %p104, %p105
      %p108 = scmp.ne.s32.totalorder %s91, %s107
      %p109 = scmp.eq.s32.totalorder %s17, 0
      %p110 = por %p108, %p109
      %p111 = scmp.le.s32.totalorder 1, %s11
      %p112 = scmp.lt.s32.totalorder %s11, 3
      %p113 = pnand %p111, %p112
      %p114 = pneg %p113
      // Predicated region
      $region9: #{output_layer.1} parent=5 // pred_check
        _
      $region10: #{output_layer.1} parent=5 // pred_check_branch
        %116 = sbr.rel (%p113) target = $region12
      $region11: #{output_layer.1} parent=5 // pred_region
        %s117 = ssub.s32 %s11, 1
        // Predicated region
        $region13: #{output_layer.1} parent=11 // pred_check
          %p118 = pneg %p49
        $region14: #{output_layer.1} parent=11 // pred_check_branch
          %120 = sbr.rel (%p118) target = $region16
        $region15: #{output_layer.1} parent=11 // pred_region
          %s121 = smul.u32 2, %s20
          %p122 = scmp.lt.s32.totalorder %s121, 1
          %s123 = scalar_select %p122, %s121, 1
          %s124 = smul.addr %s123, 4
          %s125 = scalar_lea.vmem %s0, %s124
          %s126 = smul.u32 2, %s20
        $region16: #{output_layer.1} parent=11 // pred_fallthru
          _
      $region12: #{output_layer.1} parent=5 // pred_fallthru
        _
      %p127 = scmp.lt.s32.totalorder %s11, 2
      // Predicated region
      $region17: #{output_layer.1} parent=5 // pred_check
        %p128 = pneg %p127
      $region18: #{output_layer.1} parent=5 // pred_check_branch
        %130 = sbr.rel (%p128) target = $region20
      $region19: #{output_layer.1} parent=5 // pred_region
        // Predicated region
        $region21: #{output_layer.1} parent=19 // pred_check
          %p131 = pneg %p69
        $region22: #{output_layer.1} parent=19 // pred_check_branch
          %133 = sbr.rel (%p131) target = $region24
        $region23: #{output_layer.1} parent=19 // pred_region
          %s134 = smul.u32 16, %s19
          %p135 = scmp.lt.s32.totalorder %s134, 31
          %s136 = scalar_select %p135, %s134, 31
          %s137 = smul.addr %s136, 4
          %s138 = scalar_lea.vmem %s1, %s137
          %s139 = smul.u32 16, %s19
        $region24: #{output_layer.1} parent=19 // pred_fallthru
          _
      $region20: #{output_layer.1} parent=5 // pred_fallthru
        _
      %p140 = scmp.le.s32.totalorder 1, %s11
      %p141 = scmp.lt.s32.totalorder %s11, 3
      %p142 = pnand %p140, %p141
      %p143 = pneg %p142
      // Predicated region
      $region25: #{output_layer.1} parent=5 // pred_check
        _
      $region26: #{output_layer.1} parent=5 // pred_check_branch
        %145 = sbr.rel (%p142) target = $region28
      $region27: #{output_layer.1} parent=5 // pred_region
        %s146 = ssub.s32 %s11, 1
        %s147 = smul.u32 2, %s20
        %p148 = scmp.lt.s32.totalorder %s147, 1
        %s149 = scalar_select %p148, %s147, 1
        %s150 = smul.addr %s149, 4
        %s151 = scalar_lea.vmem %s0, %s150
        %p152 = pneg %p49
        %p153 = pneg %p46
        %s154 = smul.u32 16, %s21
        %p155 = scmp.lt.s32.totalorder %s154, 31
        %s156 = scalar_select %p155, %s154, 31
        %s157 = smul.addr %s156, 4
        %s158 = scalar_lea.vmem %s1, %s157
        %p159 = pneg %p75
        %p160 = pneg %p72
        %p161 = pneg %p103
        %p162 = pneg %p100
        %s163 = sand.u32 %s90, 1
        %s164 = scalar_lea.sflag [#allocation3], %s163
        %s165 = sand.u32 %s90, 1
        %s166 = smul.addr %s165, 16
        %s167 = scalar_lea.vmem [#allocation2], %s166
        %s168 = smul.u32 2, %s20
        %p169 = scmp.lt.s32.totalorder %s168, 1
        %s170 = scalar_select %p169, %s168, 1
        %s171 = smul.addr %s170, 4
        %s172 = scalar_lea.vmem %s0, %s171
        %s173 = smul.u32 2, %s20
        %s174 = smul.u32 16, %s21
        %p175 = scmp.lt.s32.totalorder %s174, 31
        %s176 = scalar_select %p175, %s174, 31
        %s177 = smul.addr %s176, 4
        %s178 = scalar_lea.vmem %s1, %s177
        %s179 = smul.u32 16, %s21
        %s180 = smul.u32 2, %s20
        %v181 = vld [vmem:[%s172] sm:$0xf]
        %v182 = vld [vmem:[%s172 + $0x4] sm:$0xf]
        %v183 = vld [vmem:[%s178] sm:$0xf]
        %v184 = vld [vmem:[%s178 + $0x4] sm:$0xf]
        %v185 = vld [vmem:[%s178 + $0x8] sm:$0xf]
        %v186 = vld [vmem:[%s178 + $0xc] sm:$0xf]
        %v187 = vld [vmem:[%s178 + $0x10] sm:$0xf]
        %v188 = vld [vmem:[%s178 + $0x14] sm:$0xf]
        %v189 = vld [vmem:[%s178 + $0x18] sm:$0xf]
        %v190 = vld [vmem:[%s178 + $0x1c] sm:$0xf]
        %v191 = vld [vmem:[%s178 + $0x20] sm:$0xf]
        %v192 = vld [vmem:[%s178 + $0x24] sm:$0xf]
        %v193 = vld [vmem:[%s178 + $0x28] sm:$0xf]
        %v194 = vld [vmem:[%s178 + $0x2c] sm:$0xf]
        %v195 = vld [vmem:[%s178 + $0x30] sm:$0xf]
        %v196 = vld [vmem:[%s178 + $0x34] sm:$0xf]
        %v197 = vld [vmem:[%s178 + $0x38] sm:$0xf]
        %v198 = vld [vmem:[%s178 + $0x3c] sm:$0xf]
        %v201 = vunpack.c.l.b16 %v181
        %v202 = vunpack.c.l.b16 %v182
        %v203 = vpack.c.b16 %v202, %v201
        %v221 = vunpack.c.l.b16 %v183
        %v222 = vunpack.c.l.b16 %v184
        %v223 = vunpack.c.l.b16 %v185
        %v224 = vunpack.c.l.b16 %v186
        %v225 = vunpack.c.l.b16 %v187
        %v226 = vunpack.c.l.b16 %v188
        %v227 = vunpack.c.l.b16 %v189
        %v228 = vunpack.c.l.b16 %v190
        %v229 = vunpack.c.l.b16 %v191
        %v230 = vunpack.c.l.b16 %v192
        %v231 = vunpack.c.l.b16 %v193
        %v232 = vunpack.c.l.b16 %v194
        %v233 = vunpack.c.l.b16 %v195
        %v234 = vunpack.c.l.b16 %v196
        %v235 = vunpack.c.l.b16 %v197
        %v236 = vunpack.c.l.b16 %v198
        %v237 = vpack.c.b16 %v222, %v221
        %v238 = vpack.c.b16 %v224, %v223
        %v239 = vpack.c.b16 %v226, %v225
        %v240 = vpack.c.b16 %v228, %v227
        %v241 = vpack.c.b16 %v230, %v229
        %v242 = vpack.c.b16 %v232, %v231
        %v243 = vpack.c.b16 %v234, %v233
        %v244 = vpack.c.b16 %v236, %v235
        %253 = vmatpush.bf16.xpose.msra.mxu0 %v244
        %254 = vmatpush.bf16.xpose.msra.mxu0 %v243
        %255 = vmatpush.bf16.xpose.msra.mxu0 %v242
        %256 = vmatpush.bf16.xpose.msra.mxu0 %v241
        %257 = vmatpush.bf16.xpose.msra.mxu0 %v240
        %258 = vmatpush.bf16.xpose.msra.mxu0 %v239
        %259 = vmatpush.bf16.xpose.msra.mxu0 %v238
        %260 = vmatpush.bf16.xpose.msra.mxu0 %v237
        %261 = vmatmul.bf16.gmra.mxu0 %v203
        %v262 = vpop.f32.mrf.mxu0
        %v263 = vadd.f32 0.0, %v262
        %v264 = vpop.f32.mrf.mxu0
        %v265 = vadd.f32 0.0, %v264
        %266 = vdwg.mxu0
        %267 = vst [vmem:[%s167] sm:$0xff] %v263
        %268 = vst [vmem:[%s167 + $0x8] sm:$0xff] %v265
        %s269 = sand.u32 %s90, 1
        %s270 = scalar_lea.sflag [#allocation3], %s269
        %s271 = sand.u32 %s90, 1
        %s272 = smul.addr %s271, 16
        %s273 = scalar_lea.vmem [#allocation2], %s272
        // Predicated region
        $region29: #{output_layer.1} parent=27 // pred_check
          %p274 = pneg %p100
        $region30: #{output_layer.1} parent=27 // pred_check_branch
          %276 = sbr.rel (%p274) target = $region32
        $region31: #{output_layer.1} parent=27 // pred_region
          %s277 = smul.u32 2, %s20
          %279 = vsyncadd %s270, 0
          %s280 = smul.addr %s277, 2
          %s281 = sadd.s32 %s21, %s280
          %s282 = smul.addr %s281, 8
          %s283 = scalar_lea.hbm %s2, %s282
          %s284 = sshll.u32 %s273, 4
          %s285 = int_to_ptr.vmem [resolvable:$true] %s284
          %s286 = sshll.u32 %s283, 4
          %s287 = int_to_ptr.hbm [resolvable:$true] %s286
          %292 = dma.vmem_to_hbm [thread:$0]  %s285, 256, %s287, %s270, 128, 256, 8
        $region32: #{output_layer.1} parent=27 // pred_fallthru
          _
      $region28: #{output_layer.1} parent=5 // pred_fallthru
        _
      %p293 = scmp.le.s32.totalorder 2, %s11
      // Predicated region
      $region33: #{output_layer.1} parent=5 // pred_check
        %p294 = pneg %p293
      $region34: #{output_layer.1} parent=5 // pred_check_branch
        %296 = sbr.rel (%p294) target = $region36
      $region35: #{output_layer.1} parent=5 // pred_region
        %s297 = ssub.s32 %s11, 2
        // Predicated region
        $region37: #{output_layer.1} parent=35 // pred_check
          %p298 = pneg %p106
        $region38: #{output_layer.1} parent=35 // pred_check_branch
          %300 = sbr.rel (%p298) target = $region40
        $region39: #{output_layer.1} parent=35 // pred_region
          %s301 = sand.u32 %s91, 1
          %s302 = scalar_lea.sflag [#allocation3], %s301
          %s303 = sand.u32 %s91, 1
          %s304 = smul.addr %s303, 16
          %s305 = scalar_lea.vmem [#allocation2], %s304
          %307 = dma.done %s302, 256
        $region40: #{output_layer.1} parent=35 // pred_fallthru
          _
      $region36: #{output_layer.1} parent=5 // pred_fallthru
        _
    $region6: #{output_layer.1} parent=1 // loop_footer
      %s15 = sadd.s32 1, %s11
    $region7: #{output_layer.1} parent=1 // loop_footer_branch
      %10 = sbr.rel target = $region3
    $region8: #{output_layer.1} parent=1 // loop_exit
      _
    %308 = vsyncpa [#allocation3], 1
    %s309 = scalar_lea.sflag [#allocation3], 1
    %310 = vsyncpa %s309, 1

</llo_original>
